<compile_context>
chip_gen: v5e
topology: v5e:2x2
jax: 0.10.0
libtpu: 0.0.40
codegen_flags: <defaults>
</compile_context>

<pallas_src>
import functools

import jax
import jax.numpy as jnp
from jax.experimental import pallas as pl
from jax.experimental.pallas import tpu as pltpu

EPS = 1e-5


def double_conv_kernel(x_ref, w1f_ref, g1_ref, be1_ref, w2f_ref, g2_ref, be2_ref,
                       out_ref, xpad_ref, ypad_ref,
                       *, N, H, W, Cin, Cout, compute_dtype):
    NH = N * H
    WCout = W * Cout
    inv_cnt = 1.0 / float(N * H * W)

    # Channel selector: sel[c, w*Cout + c'] == 1.0 iff c == c'.  Reduces per-(w, channel)
    # lane statistics to per-channel and broadcasts per-channel scale/shift back across
    # the folded (W*Cout) lane axis without transposes.
    lane = jax.lax.broadcasted_iota(jnp.int32, (Cout, WCout), 1)
    chan = jax.lax.broadcasted_iota(jnp.int32, (Cout, WCout), 0)
    sel = (lane % Cout == chan).astype(jnp.float32)

    def zero_h_halo(pad_ref):
        # Only the 1-row top/bottom H halo needs zeroing (W edge is baked into the
        # weights): 2 single-row stores per conv, no narrow masked column writes.
        n, hp, wc = pad_ref.shape
        pad_ref[:, 0:1, :] = jnp.zeros((n, 1, wc), jnp.float32)
        pad_ref[:, hp - 1:hp, :] = jnp.zeros((n, 1, wc), jnp.float32)

    def conv3x3(pad_ref, wf_ref):
        # One accumulating MXU matmul per kh: LHS = dense lane-aligned row slice
        # (NH, W*C), RHS = folded per-kh weight (W*C, W*Cout).  No im2col buffer,
        # no col writeback, f32 accumulation.
        wc = pad_ref.shape[2]
        acc = None
        for kh in range(3):
            lhs = pad_ref[:, kh:kh + H, :].reshape(NH, wc).astype(compute_dtype)
            part = jnp.dot(lhs, wf_ref[kh], preferred_element_type=jnp.float32)
            acc = part if acc is None else acc + part
        return acc                                              # (NH, W*Cout) f32

    def bn_relu(acc, g_ref, be_ref):
        # Training-mode BatchNorm with centered two-pass batch statistics (f32), then ReLU.
        s_wc = jnp.sum(acc, axis=0, keepdims=True)              # (1, W*Cout)
        s_c = jnp.sum(sel * s_wc, axis=1, keepdims=True)        # (Cout, 1)
        mean_c = s_c * inv_cnt
        mean_wc = jnp.sum(sel * mean_c, axis=0, keepdims=True)  # (1, W*Cout)
        d = acc - mean_wc
        v_wc = jnp.sum(d * d, axis=0, keepdims=True)            # (1, W*Cout)
        var_c = jnp.sum(sel * v_wc, axis=1, keepdims=True) * inv_cnt
        scale_c = g_ref[...] * jax.lax.rsqrt(var_c + EPS)       # (Cout, 1)
        scale_wc = jnp.sum(sel * scale_c, axis=0, keepdims=True)
        be_wc = jnp.sum(sel * be_ref[...], axis=0, keepdims=True)
        return jnp.maximum(d * scale_wc + be_wc, 0.0)

    # ---------------- conv1 -> BN -> ReLU ----------------
    zero_h_halo(xpad_ref)
    xpad_ref[:, 1:H + 1, :] = x_ref[...]                        # dense, lane-offset-0 store
    y = bn_relu(conv3x3(xpad_ref, w1f_ref), g1_ref, be1_ref)    # (NH, W*Cout)

    # ---------------- conv2 -> BN -> ReLU ----------------
    zero_h_halo(ypad_ref)
    ypad_ref[:, 1:H + 1, :] = y.reshape(N, H, WCout)            # dense, lane-offset-0 store
    out_ref[...] = bn_relu(conv3x3(ypad_ref, w2f_ref), g2_ref, be2_ref)   # lane-dense store


def _fold_conv_weights(w_hwio, W):
    """Fold a (3, 3, Ci, Co) HWIO weight into (3, W*Ci, W*Co): for each kh, a matrix that
    maps an UNPADDED input row (indexed (wi, ci)) to every output column (wo, co).  The
    W-edge zero padding is realized by zeroing out-of-range taps in the weight itself."""
    KH, KW, Ci, Co = w_hwio.shape
    wi = jnp.arange(W)[:, None]                     # unpadded input column
    wo = jnp.arange(W)[None, :]                     # output column
    kw = wi - wo + 1                                # tap index (padding = 1)
    valid = (kw >= 0) & (kw < KW)
    kw_safe = jnp.clip(kw, 0, KW - 1)
    wg = w_hwio[:, kw_safe, :, :]                   # (KH, W, W, Ci, Co) indexed [wi, wo]
    wg = jnp.where(valid[None, :, :, None, None], wg, 0.0)
    wf = jnp.transpose(wg, (0, 1, 3, 2, 4))         # (KH, wi, Ci, wo, Co)
    return wf.reshape(KH, W * Ci, W * Co)


def _double_conv_nhwc(x_nhwc, params, compute_dtype):
    """x_nhwc: (N, H, W, Cin) f32 -> (N, H, W, Cout) f32, everything VMEM-resident."""
    w1, b1, g1, be1, w2, b2, g2, be2 = params
    del b1, b2   # conv bias is cancelled exactly by training-mode BatchNorm
    N, H, W, Cin = x_nhwc.shape
    Cout = w1.shape[-1]

    x_folded = x_nhwc.reshape(N, H, W * Cin)
    w1f = _fold_conv_weights(w1, W).astype(compute_dtype)   # (3, W*Cin,  W*Cout)
    w2f = _fold_conv_weights(w2, W).astype(compute_dtype)   # (3, W*Cout, W*Cout)

    vmem = pl.BlockSpec(memory_space=pltpu.MemorySpace.VMEM)
    kernel = functools.partial(double_conv_kernel, N=N, H=H, W=W, Cin=Cin, Cout=Cout,
                               compute_dtype=compute_dtype)
    out2d = pl.pallas_call(
        kernel,
        out_shape=jax.ShapeDtypeStruct((N * H, W * Cout), jnp.float32),
        in_specs=[vmem] * 7,
        out_specs=vmem,
        scratch_shapes=[
            pltpu.VMEM((N, H + 2, W * Cin), jnp.float32),    # H-padded input (1-row halo)
            pltpu.VMEM((N, H + 2, W * Cout), jnp.float32),   # H-padded intermediate
        ],
        # Explicit, and <= ~48 MiB so the same setting is valid on 64 MiB-VMEM parts (v7x).
        compiler_params=pltpu.CompilerParams(vmem_limit_bytes=32 * 1024 * 1024),
    )(
        x_folded, w1f, g1.reshape(Cout, 1), be1.reshape(Cout, 1),
        w2f, g2.reshape(Cout, 1), be2.reshape(Cout, 1),
    )
    return out2d.reshape(N, H, W, Cout)


@functools.partial(jax.jit, static_argnames=("use_bf16",))
def inconv_forward_nhwc(x_nhwc, params, use_bf16=False):
    """NHWC entry point: no relayout passes at all."""
    dt = jnp.bfloat16 if use_bf16 else jnp.float32
    return _double_conv_nhwc(x_nhwc, params, dt)


@functools.partial(jax.jit, static_argnames=("use_bf16",))
def inconv_forward(x_nchw, params, use_bf16=False):
    """PyTorch-layout entry point: (N, Cin, H, W) f32 -> (N, Cout, H, W) f32.
    The two transposes are the module-boundary relayout cost (see review item 8)."""
    dt = jnp.bfloat16 if use_bf16 else jnp.float32
    x_nhwc = jnp.transpose(x_nchw, (0, 2, 3, 1))
    out_nhwc = _double_conv_nhwc(x_nhwc, params, dt)
    return jnp.transpose(out_nhwc, (0, 3, 1, 2))


def init_params(key, in_ch, out_ch):
    """Deterministic init mirroring PyTorch defaults (uniform conv weights/bias,
    gamma=1 / beta=0 for BN). Conv weights stored as HWIO (3, 3, Cin, Cout)."""
    k1, k2, k3, k4 = jax.random.split(key, 4)
    fan1 = in_ch * 9
    bound1 = 1.0 / jnp.sqrt(fan1)
    w1 = jax.random.uniform(k1, (3, 3, in_ch, out_ch), jnp.float32, -bound1, bound1)
    b1 = jax.random.uniform(k2, (out_ch,), jnp.float32, -bound1, bound1)
    fan2 = out_ch * 9
    bound2 = 1.0 / jnp.sqrt(fan2)
    w2 = jax.random.uniform(k3, (3, 3, out_ch, out_ch), jnp.float32, -bound2, bound2)
    b2 = jax.random.uniform(k4, (out_ch,), jnp.float32, -bound2, bound2)
    g1 = jnp.ones((out_ch,), jnp.float32)
    be1 = jnp.zeros((out_ch,), jnp.float32)
    g2 = jnp.ones((out_ch,), jnp.float32)
    be2 = jnp.zeros((out_ch,), jnp.float32)
    return (w1, b1, g1, be1, w2, b2, g2, be2)


def _reference(x_nchw, params):
    """Pure-JAX reference (lax conv, with conv bias, training-mode BN) for correctness."""
    w1, b1, g1, be1, w2, b2, g2, be2 = params

    def conv_bn_relu(x, w, b, g, be):
        y = jax.lax.conv_general_dilated(
            x, w, window_strides=(1, 1), padding="SAME",
            dimension_numbers=("NHWC", "HWIO", "NHWC"))
        y = y + b
        mean = jnp.mean(y, axis=(0, 1, 2), keepdims=True)
        var = jnp.mean((y - mean) ** 2, axis=(0, 1, 2), keepdims=True)
        y = (y - mean) * jax.lax.rsqrt(var + EPS) * g + be
        return jnp.maximum(y, 0.0)

    x = jnp.transpose(x_nchw, (0, 2, 3, 1))
    x = conv_bn_relu(x, w1, b1, g1, be1)
    x = conv_bn_relu(x, w2, b2, g2, be2)
    return jnp.transpose(x, (0, 3, 1, 2))


if __name__ == "__main__":
    key = jax.random.PRNGKey(0)
    kx, kp = jax.random.split(key)

    N, Cin, Cout, H, W = 2, 4, 8, 16, 16
    x = jax.random.normal(kx, (N, Cin, H, W), jnp.float32)
    params = init_params(kp, Cin, Cout)

    ref = _reference(x, params)

    # f32 path: exact parity with the f32 reference.
    out = jax.block_until_ready(inconv_forward(x, params, use_bf16=False))
    assert out.shape == (N, Cout, H, W), out.shape
    max_err = jnp.max(jnp.abs(out - ref))
    assert jnp.allclose(out, ref, rtol=1e-4, atol=1e-4), f"f32 max abs err {max_err}"

    # bf16 MXU path: bf16 operands, f32 accumulation + f32 BN stats; loose tolerance.
    out_bf16 = jax.block_until_ready(inconv_forward(x, params, use_bf16=True))
    max_err_bf16 = jnp.max(jnp.abs(out_bf16 - ref))
    assert bool(jnp.all(jnp.isfinite(out_bf16)))
    assert float(max_err_bf16) < 0.2, f"bf16 max abs err {max_err_bf16}"

    print("KERNEL_OK")
</pallas_src>

<mosaic_0001>
module attributes {stable_mosaic.version = 11 : i64} {
  func.func @double_conv_kernel(%arg0: memref<2x16x64xf32, #tpu.memory_space<vmem>>, %arg1: memref<3x64x128xf32, #tpu.memory_space<vmem>>, %arg2: memref<8x1xf32, #tpu.memory_space<vmem>>, %arg3: memref<8x1xf32, #tpu.memory_space<vmem>>, %arg4: memref<3x128x128xf32, #tpu.memory_space<vmem>>, %arg5: memref<8x1xf32, #tpu.memory_space<vmem>>, %arg6: memref<8x1xf32, #tpu.memory_space<vmem>>, %arg7: memref<32x128xf32, #tpu.memory_space<vmem>>, %arg8: memref<2x18x64xf32, #tpu.memory_space<vmem>>, %arg9: memref<2x18x128xf32, #tpu.memory_space<vmem>>) attributes {dimension_semantics = [], scalar_prefetch = 0 : i64, scratch_operands = 2 : i64, tpu.core_type = #tpu.core_type<tc>} {
    %0 = tpu.iota {dimensions = array<i32: 1>} : vector<8x128xi32>
    %1 = tpu.iota {dimensions = array<i32: 0>} : vector<8x128xi32>
    %c8_i32 = arith.constant 8 : i32
    %c0_i32 = arith.constant 0 : i32
    %2 = arith.cmpi eq, %c8_i32, %c0_i32 : i32
    %c1_i32 = arith.constant 1 : i32
    %3 = arith.select %2, %c1_i32, %c8_i32 : i32
    %4 = vector.broadcast %3 : i32 to vector<8x128xi32>
    %5 = arith.remsi %0, %4 : vector<8x128xi32>
    %c0_i32_0 = arith.constant 0 : i32
    %6 = vector.broadcast %c0_i32_0 : i32 to vector<8x128xi32>
    %7 = arith.cmpi ne, %5, %6 : vector<8x128xi32>
    %c0_i32_1 = arith.constant 0 : i32
    %8 = vector.broadcast %c0_i32_1 : i32 to vector<8x128xi32>
    %9 = arith.cmpi slt, %5, %8 : vector<8x128xi32>
    %c0_i32_2 = arith.constant 0 : i32
    %10 = arith.cmpi slt, %3, %c0_i32_2 : i32
    %11 = vector.broadcast %10 : i1 to vector<8x128xi1>
    %12 = vector.broadcast %11 : vector<8x128xi1> to vector<8x128xi1>
    %13 = arith.xori %9, %12 : vector<8x128xi1>
    %14 = arith.andi %13, %7 : vector<8x128xi1>
    %15 = vector.broadcast %3 : i32 to vector<8x128xi32>
    %16 = arith.addi %5, %15 : vector<8x128xi32>
    %17 = arith.select %14, %16, %5 : vector<8x128xi1>, vector<8x128xi32>
    %18 = arith.cmpi eq, %17, %1 : vector<8x128xi32>
    %19 = arith.extui %18 : vector<8x128xi1> to vector<8x128xi32>
    %20 = arith.sitofp %19 : vector<8x128xi32> to vector<8x128xf32>
    %cst = arith.constant 0.000000e+00 : f32
    %21 = vector.broadcast %cst : f32 to vector<2x1x64xf32>
    %c0 = arith.constant 0 : index
    %c0_3 = arith.constant 0 : index
    %c0_4 = arith.constant 0 : index
    %22 = vector.load %arg8[%c0, %c0_3, %c0_4] : memref<2x18x64xf32, #tpu.memory_space<vmem>>, vector<2x1x64xf32>
    tpu.vector_store %arg8[%c0, %c0_3, %c0_4], %21 {strides = array<i32>} : memref<2x18x64xf32, #tpu.memory_space<vmem>>, vector<2x1x64xf32>,
    %cst_5 = arith.constant 0.000000e+00 : f32
    %23 = vector.broadcast %cst_5 : f32 to vector<2x1x64xf32>
    %c0_6 = arith.constant 0 : index
    %c17 = arith.constant 17 : index
    %c0_7 = arith.constant 0 : index
    %24 = vector.load %arg8[%c0_6, %c17, %c0_7] : memref<2x18x64xf32, #tpu.memory_space<vmem>>, vector<2x1x64xf32>
    tpu.vector_store %arg8[%c0_6, %c17, %c0_7], %23 {strides = array<i32>} : memref<2x18x64xf32, #tpu.memory_space<vmem>>, vector<2x1x64xf32>,
    %c0_8 = arith.constant 0 : index
    %c0_9 = arith.constant 0 : index
    %c0_10 = arith.constant 0 : index
    %25 = vector.load %arg0[%c0_8, %c0_9, %c0_10] : memref<2x16x64xf32, #tpu.memory_space<vmem>>, vector<2x16x64xf32>
    %c0_11 = arith.constant 0 : index
    %c1 = arith.constant 1 : index
    %c0_12 = arith.constant 0 : index
    %26 = vector.load %arg8[%c0_11, %c1, %c0_12] : memref<2x18x64xf32, #tpu.memory_space<vmem>>, vector<2x16x64xf32>
    tpu.vector_store %arg8[%c0_11, %c1, %c0_12], %25 {strides = array<i32>} : memref<2x18x64xf32, #tpu.memory_space<vmem>>, vector<2x16x64xf32>,
    %c0_13 = arith.constant 0 : index
    %c0_14 = arith.constant 0 : index
    %c0_15 = arith.constant 0 : index
    %27 = vector.load %arg8[%c0_13, %c0_14, %c0_15] : memref<2x18x64xf32, #tpu.memory_space<vmem>>, vector<2x16x64xf32>
    %28 = vector.shape_cast %27 : vector<2x16x64xf32> to vector<32x64xf32>
    %c0_16 = arith.constant 0 : index
    %c0_17 = arith.constant 0 : index
    %c0_18 = arith.constant 0 : index
    %29 = vector.load %arg1[%c0_16, %c0_17, %c0_18] : memref<3x64x128xf32, #tpu.memory_space<vmem>>, vector<1x64x128xf32>
    %30 = vector.shape_cast %29 : vector<1x64x128xf32> to vector<64x128xf32>
    %cst_19 = arith.constant dense<0.000000e+00> : vector<32x128xf32>
    %31 = tpu.matmul %28, %30, %cst_19 {dimension_numbers = #tpu.dot_dimension_numbers<[1], [0], [0], [1], [0, 0, 1, 1], [], []>} : vector<32x64xf32>, vector<64x128xf32>, vector<32x128xf32> -> vector<32x128xf32>
    %c0_20 = arith.constant 0 : index
    %c1_21 = arith.constant 1 : index
    %c0_22 = arith.constant 0 : index
    %32 = vector.load %arg8[%c0_20, %c1_21, %c0_22] : memref<2x18x64xf32, #tpu.memory_space<vmem>>, vector<2x16x64xf32>
    %33 = vector.shape_cast %32 : vector<2x16x64xf32> to vector<32x64xf32>
    %c1_23 = arith.constant 1 : index
    %c0_24 = arith.constant 0 : index
    %c0_25 = arith.constant 0 : index
    %34 = vector.load %arg1[%c1_23, %c0_24, %c0_25] : memref<3x64x128xf32, #tpu.memory_space<vmem>>, vector<1x64x128xf32>
    %35 = vector.shape_cast %34 : vector<1x64x128xf32> to vector<64x128xf32>
    %cst_26 = arith.constant dense<0.000000e+00> : vector<32x128xf32>
    %36 = tpu.matmul %33, %35, %cst_26 {dimension_numbers = #tpu.dot_dimension_numbers<[1], [0], [0], [1], [0, 0, 1, 1], [], []>} : vector<32x64xf32>, vector<64x128xf32>, vector<32x128xf32> -> vector<32x128xf32>
    %37 = arith.addf %31, %36 : vector<32x128xf32>
    %c0_27 = arith.constant 0 : index
    %c2 = arith.constant 2 : index
    %c0_28 = arith.constant 0 : index
    %38 = vector.load %arg8[%c0_27, %c2, %c0_28] : memref<2x18x64xf32, #tpu.memory_space<vmem>>, vector<2x16x64xf32>
    %39 = vector.shape_cast %38 : vector<2x16x64xf32> to vector<32x64xf32>
    %c2_29 = arith.constant 2 : index
    %c0_30 = arith.constant 0 : index
    %c0_31 = arith.constant 0 : index
    %40 = vector.load %arg1[%c2_29, %c0_30, %c0_31] : memref<3x64x128xf32, #tpu.memory_space<vmem>>, vector<1x64x128xf32>
    %41 = vector.shape_cast %40 : vector<1x64x128xf32> to vector<64x128xf32>
    %cst_32 = arith.constant dense<0.000000e+00> : vector<32x128xf32>
    %42 = tpu.matmul %39, %41, %cst_32 {dimension_numbers = #tpu.dot_dimension_numbers<[1], [0], [0], [1], [0, 0, 1, 1], [], []>} : vector<32x64xf32>, vector<64x128xf32>, vector<32x128xf32> -> vector<32x128xf32>
    %43 = arith.addf %37, %42 : vector<32x128xf32>
    %cst_33 = arith.constant dense<0.000000e+00> : vector<128xf32>
    %44 = vector.multi_reduction <add>, %43, %cst_33 [0] : vector<32x128xf32> to vector<128xf32>
    %45 = vector.shape_cast %44 : vector<128xf32> to vector<1x128xf32>
    %46 = vector.broadcast %45 : vector<1x128xf32> to vector<8x128xf32>
    %47 = arith.mulf %20, %46 : vector<8x128xf32>
    %cst_34 = arith.constant dense<0.000000e+00> : vector<8xf32>
    %48 = vector.multi_reduction <add>, %47, %cst_34 [1] : vector<8x128xf32> to vector<8xf32>
    %49 = vector.shape_cast %48 : vector<8xf32> to vector<8x1xf32>
    %cst_35 = arith.constant 0.001953125 : f32
    %50 = vector.broadcast %cst_35 : f32 to vector<8x1xf32>
    %51 = arith.mulf %49, %50 : vector<8x1xf32>
    %52 = vector.broadcast %51 : vector<8x1xf32> to vector<8x128xf32>
    %53 = arith.mulf %20, %52 : vector<8x128xf32>
    %cst_36 = arith.constant dense<0.000000e+00> : vector<128xf32>
    %54 = vector.multi_reduction <add>, %53, %cst_36 [0] : vector<8x128xf32> to vector<128xf32>
    %55 = vector.shape_cast %54 : vector<128xf32> to vector<1x128xf32>
    %56 = vector.broadcast %55 : vector<1x128xf32> to vector<32x128xf32>
    %57 = arith.subf %43, %56 : vector<32x128xf32>
    %58 = arith.mulf %57, %57 : vector<32x128xf32>
    %cst_37 = arith.constant dense<0.000000e+00> : vector<128xf32>
    %59 = vector.multi_reduction <add>, %58, %cst_37 [0] : vector<32x128xf32> to vector<128xf32>
    %60 = vector.shape_cast %59 : vector<128xf32> to vector<1x128xf32>
    %61 = vector.broadcast %60 : vector<1x128xf32> to vector<8x128xf32>
    %62 = arith.mulf %20, %61 : vector<8x128xf32>
    %cst_38 = arith.constant dense<0.000000e+00> : vector<8xf32>
    %63 = vector.multi_reduction <add>, %62, %cst_38 [1] : vector<8x128xf32> to vector<8xf32>
    %64 = vector.shape_cast %63 : vector<8xf32> to vector<8x1xf32>
    %cst_39 = arith.constant 0.001953125 : f32
    %65 = vector.broadcast %cst_39 : f32 to vector<8x1xf32>
    %66 = arith.mulf %64, %65 : vector<8x1xf32>
    %c0_40 = arith.constant 0 : index
    %c0_41 = arith.constant 0 : index
    %67 = vector.load %arg2[%c0_40, %c0_41] : memref<8x1xf32, #tpu.memory_space<vmem>>, vector<8x1xf32>
    %cst_42 = arith.constant 9.99999974E-6 : f32
    %68 = vector.broadcast %cst_42 : f32 to vector<8x1xf32>
    %69 = arith.addf %66, %68 : vector<8x1xf32>
    %70 = math.rsqrt %69 : vector<8x1xf32>
    %71 = arith.mulf %67, %70 : vector<8x1xf32>
    %72 = vector.broadcast %71 : vector<8x1xf32> to vector<8x128xf32>
    %73 = arith.mulf %20, %72 : vector<8x128xf32>
    %cst_43 = arith.constant dense<0.000000e+00> : vector<128xf32>
    %74 = vector.multi_reduction <add>, %73, %cst_43 [0] : vector<8x128xf32> to vector<128xf32>
    %75 = vector.shape_cast %74 : vector<128xf32> to vector<1x128xf32>
    %c0_44 = arith.constant 0 : index
    %c0_45 = arith.constant 0 : index
    %76 = vector.load %arg3[%c0_44, %c0_45] : memref<8x1xf32, #tpu.memory_space<vmem>>, vector<8x1xf32>
    %77 = vector.broadcast %76 : vector<8x1xf32> to vector<8x128xf32>
    %78 = arith.mulf %20, %77 : vector<8x128xf32>
    %cst_46 = arith.constant dense<0.000000e+00> : vector<128xf32>
    %79 = vector.multi_reduction <add>, %78, %cst_46 [0] : vector<8x128xf32> to vector<128xf32>
    %80 = vector.shape_cast %79 : vector<128xf32> to vector<1x128xf32>
    %81 = vector.broadcast %75 : vector<1x128xf32> to vector<32x128xf32>
    %82 = arith.mulf %57, %81 : vector<32x128xf32>
    %83 = vector.broadcast %80 : vector<1x128xf32> to vector<32x128xf32>
    %84 = arith.addf %82, %83 : vector<32x128xf32>
    %cst_47 = arith.constant 0.000000e+00 : f32
    %85 = vector.broadcast %cst_47 : f32 to vector<32x128xf32>
    %86 = arith.maximumf %84, %85 : vector<32x128xf32>
    %cst_48 = arith.constant 0.000000e+00 : f32
    %87 = vector.broadcast %cst_48 : f32 to vector<2x1x128xf32>
    %c0_49 = arith.constant 0 : index
    %c0_50 = arith.constant 0 : index
    %c0_51 = arith.constant 0 : index
    %88 = vector.load %arg9[%c0_49, %c0_50, %c0_51] : memref<2x18x128xf32, #tpu.memory_space<vmem>>, vector<2x1x128xf32>
    tpu.vector_store %arg9[%c0_49, %c0_50, %c0_51], %87 {strides = array<i32>} : memref<2x18x128xf32, #tpu.memory_space<vmem>>, vector<2x1x128xf32>,
    %cst_52 = arith.constant 0.000000e+00 : f32
    %89 = vector.broadcast %cst_52 : f32 to vector<2x1x128xf32>
    %c0_53 = arith.constant 0 : index
    %c17_54 = arith.constant 17 : index
    %c0_55 = arith.constant 0 : index
    %90 = vector.load %arg9[%c0_53, %c17_54, %c0_55] : memref<2x18x128xf32, #tpu.memory_space<vmem>>, vector<2x1x128xf32>
    tpu.vector_store %arg9[%c0_53, %c17_54, %c0_55], %89 {strides = array<i32>} : memref<2x18x128xf32, #tpu.memory_space<vmem>>, vector<2x1x128xf32>,
    %91 = vector.shape_cast %86 : vector<32x128xf32> to vector<2x16x128xf32>
    %c0_56 = arith.constant 0 : index
    %c1_57 = arith.constant 1 : index
    %c0_58 = arith.constant 0 : index
    %92 = vector.load %arg9[%c0_56, %c1_57, %c0_58] : memref<2x18x128xf32, #tpu.memory_space<vmem>>, vector<2x16x128xf32>
    tpu.vector_store %arg9[%c0_56, %c1_57, %c0_58], %91 {strides = array<i32>} : memref<2x18x128xf32, #tpu.memory_space<vmem>>, vector<2x16x128xf32>,
    %c0_59 = arith.constant 0 : index
    %c0_60 = arith.constant 0 : index
    %c0_61 = arith.constant 0 : index
    %93 = vector.load %arg9[%c0_59, %c0_60, %c0_61] : memref<2x18x128xf32, #tpu.memory_space<vmem>>, vector<2x16x128xf32>
    %94 = vector.shape_cast %93 : vector<2x16x128xf32> to vector<32x128xf32>
    %c0_62 = arith.constant 0 : index
    %c0_63 = arith.constant 0 : index
    %c0_64 = arith.constant 0 : index
    %95 = vector.load %arg4[%c0_62, %c0_63, %c0_64] : memref<3x128x128xf32, #tpu.memory_space<vmem>>, vector<1x128x128xf32>
    %96 = vector.shape_cast %95 : vector<1x128x128xf32> to vector<128x128xf32>
    %cst_65 = arith.constant dense<0.000000e+00> : vector<32x128xf32>
    %97 = tpu.matmul %94, %96, %cst_65 {dimension_numbers = #tpu.dot_dimension_numbers<[1], [0], [0], [1], [0, 0, 1, 1], [], []>} : vector<32x128xf32>, vector<128x128xf32>, vector<32x128xf32> -> vector<32x128xf32>
    %c0_66 = arith.constant 0 : index
    %c1_67 = arith.constant 1 : index
    %c0_68 = arith.constant 0 : index
    %98 = vector.load %arg9[%c0_66, %c1_67, %c0_68] : memref<2x18x128xf32, #tpu.memory_space<vmem>>, vector<2x16x128xf32>
    %99 = vector.shape_cast %98 : vector<2x16x128xf32> to vector<32x128xf32>
    %c1_69 = arith.constant 1 : index
    %c0_70 = arith.constant 0 : index
    %c0_71 = arith.constant 0 : index
    %100 = vector.load %arg4[%c1_69, %c0_70, %c0_71] : memref<3x128x128xf32, #tpu.memory_space<vmem>>, vector<1x128x128xf32>
    %101 = vector.shape_cast %100 : vector<1x128x128xf32> to vector<128x128xf32>
    %cst_72 = arith.constant dense<0.000000e+00> : vector<32x128xf32>
    %102 = tpu.matmul %99, %101, %cst_72 {dimension_numbers = #tpu.dot_dimension_numbers<[1], [0], [0], [1], [0, 0, 1, 1], [], []>} : vector<32x128xf32>, vector<128x128xf32>, vector<32x128xf32> -> vector<32x128xf32>
    %103 = arith.addf %97, %102 : vector<32x128xf32>
    %c0_73 = arith.constant 0 : index
    %c2_74 = arith.constant 2 : index
    %c0_75 = arith.constant 0 : index
    %104 = vector.load %arg9[%c0_73, %c2_74, %c0_75] : memref<2x18x128xf32, #tpu.memory_space<vmem>>, vector<2x16x128xf32>
    %105 = vector.shape_cast %104 : vector<2x16x128xf32> to vector<32x128xf32>
    %c2_76 = arith.constant 2 : index
    %c0_77 = arith.constant 0 : index
    %c0_78 = arith.constant 0 : index
    %106 = vector.load %arg4[%c2_76, %c0_77, %c0_78] : memref<3x128x128xf32, #tpu.memory_space<vmem>>, vector<1x128x128xf32>
    %107 = vector.shape_cast %106 : vector<1x128x128xf32> to vector<128x128xf32>
    %cst_79 = arith.constant dense<0.000000e+00> : vector<32x128xf32>
    %108 = tpu.matmul %105, %107, %cst_79 {dimension_numbers = #tpu.dot_dimension_numbers<[1], [0], [0], [1], [0, 0, 1, 1], [], []>} : vector<32x128xf32>, vector<128x128xf32>, vector<32x128xf32> -> vector<32x128xf32>
    %109 = arith.addf %103, %108 : vector<32x128xf32>
    %cst_80 = arith.constant dense<0.000000e+00> : vector<128xf32>
    %110 = vector.multi_reduction <add>, %109, %cst_80 [0] : vector<32x128xf32> to vector<128xf32>
    %111 = vector.shape_cast %110 : vector<128xf32> to vector<1x128xf32>
    %112 = vector.broadcast %111 : vector<1x128xf32> to vector<8x128xf32>
    %113 = arith.mulf %20, %112 : vector<8x128xf32>
    %cst_81 = arith.constant dense<0.000000e+00> : vector<8xf32>
    %114 = vector.multi_reduction <add>, %113, %cst_81 [1] : vector<8x128xf32> to vector<8xf32>
    %115 = vector.shape_cast %114 : vector<8xf32> to vector<8x1xf32>
    %cst_82 = arith.constant 0.001953125 : f32
    %116 = vector.broadcast %cst_82 : f32 to vector<8x1xf32>
    %117 = arith.mulf %115, %116 : vector<8x1xf32>
    %118 = vector.broadcast %117 : vector<8x1xf32> to vector<8x128xf32>
    %119 = arith.mulf %20, %118 : vector<8x128xf32>
    %cst_83 = arith.constant dense<0.000000e+00> : vector<128xf32>
    %120 = vector.multi_reduction <add>, %119, %cst_83 [0] : vector<8x128xf32> to vector<128xf32>
    %121 = vector.shape_cast %120 : vector<128xf32> to vector<1x128xf32>
    %122 = vector.broadcast %121 : vector<1x128xf32> to vector<32x128xf32>
    %123 = arith.subf %109, %122 : vector<32x128xf32>
    %124 = arith.mulf %123, %123 : vector<32x128xf32>
    %cst_84 = arith.constant dense<0.000000e+00> : vector<128xf32>
    %125 = vector.multi_reduction <add>, %124, %cst_84 [0] : vector<32x128xf32> to vector<128xf32>
    %126 = vector.shape_cast %125 : vector<128xf32> to vector<1x128xf32>
    %127 = vector.broadcast %126 : vector<1x128xf32> to vector<8x128xf32>
    %128 = arith.mulf %20, %127 : vector<8x128xf32>
    %cst_85 = arith.constant dense<0.000000e+00> : vector<8xf32>
    %129 = vector.multi_reduction <add>, %128, %cst_85 [1] : vector<8x128xf32> to vector<8xf32>
    %130 = vector.shape_cast %129 : vector<8xf32> to vector<8x1xf32>
    %cst_86 = arith.constant 0.001953125 : f32
    %131 = vector.broadcast %cst_86 : f32 to vector<8x1xf32>
    %132 = arith.mulf %130, %131 : vector<8x1xf32>
    %c0_87 = arith.constant 0 : index
    %c0_88 = arith.constant 0 : index
    %133 = vector.load %arg5[%c0_87, %c0_88] : memref<8x1xf32, #tpu.memory_space<vmem>>, vector<8x1xf32>
    %cst_89 = arith.constant 9.99999974E-6 : f32
    %134 = vector.broadcast %cst_89 : f32 to vector<8x1xf32>
    %135 = arith.addf %132, %134 : vector<8x1xf32>
    %136 = math.rsqrt %135 : vector<8x1xf32>
    %137 = arith.mulf %133, %136 : vector<8x1xf32>
    %138 = vector.broadcast %137 : vector<8x1xf32> to vector<8x128xf32>
    %139 = arith.mulf %20, %138 : vector<8x128xf32>
    %cst_90 = arith.constant dense<0.000000e+00> : vector<128xf32>
    %140 = vector.multi_reduction <add>, %139, %cst_90 [0] : vector<8x128xf32> to vector<128xf32>
    %141 = vector.shape_cast %140 : vector<128xf32> to vector<1x128xf32>
    %c0_91 = arith.constant 0 : index
    %c0_92 = arith.constant 0 : index
    %142 = vector.load %arg6[%c0_91, %c0_92] : memref<8x1xf32, #tpu.memory_space<vmem>>, vector<8x1xf32>
    %143 = vector.broadcast %142 : vector<8x1xf32> to vector<8x128xf32>
    %144 = arith.mulf %20, %143 : vector<8x128xf32>
    %cst_93 = arith.constant dense<0.000000e+00> : vector<128xf32>
    %145 = vector.multi_reduction <add>, %144, %cst_93 [0] : vector<8x128xf32> to vector<128xf32>
    %146 = vector.shape_cast %145 : vector<128xf32> to vector<1x128xf32>
    %147 = vector.broadcast %141 : vector<1x128xf32> to vector<32x128xf32>
    %148 = arith.mulf %123, %147 : vector<32x128xf32>
    %149 = vector.broadcast %146 : vector<1x128xf32> to vector<32x128xf32>
    %150 = arith.addf %148, %149 : vector<32x128xf32>
    %cst_94 = arith.constant 0.000000e+00 : f32
    %151 = vector.broadcast %cst_94 : f32 to vector<32x128xf32>
    %152 = arith.maximumf %150, %151 : vector<32x128xf32>
    %c0_95 = arith.constant 0 : index
    %c0_96 = arith.constant 0 : index
    %153 = vector.load %arg7[%c0_95, %c0_96] : memref<32x128xf32, #tpu.memory_space<vmem>>, vector<32x128xf32>
    tpu.vector_store %arg7[%c0_95, %c0_96], %152 {strides = array<i32>} : memref<32x128xf32, #tpu.memory_space<vmem>>, vector<32x128xf32>,
    return
  }
}

</mosaic_0001>

<llo_original>
// kernel: inconv_forward.1
$region0: #{inconv_forward.1}
  #allocation0 [shape = 'u32[]', space=smem, size = 0x4, offset = 0x4, fixed_abs, tag = 'smem constant byte address 0x4 - core index']
  #allocation1 [shape = 'u32[72,128]{1,0:T(1,128)}', space=vmem, size = 0x9000, scoped, tag = 'internal scratch']
  #allocation2 [shape = 'f32[2,18,64]{2,1,0:T(8,128)}', space=vmem, size = 0x6000, scoped, tag = 'scratch operand']
  #allocation3 [shape = 'f32[2,18,128]{2,1,0:T(8,128)}', space=vmem, size = 0x6000, scoped, tag = 'scratch operand']
  %s0 = inlined_call_operand.vmem [shape: f32[2,16,64], index: 0, kind: input, shape index: {}]
  %s1 = inlined_call_operand.vmem [shape: f32[3,64,128], index: 1, kind: input, shape index: {}]
  %s2 = inlined_call_operand.vmem [shape: f32[8,1], index: 2, kind: input, shape index: {}]
  %s3 = inlined_call_operand.vmem [shape: f32[8,1], index: 3, kind: input, shape index: {}]
  %s4 = inlined_call_operand.vmem [shape: f32[3,128,128], index: 4, kind: input, shape index: {}]
  %s5 = inlined_call_operand.vmem [shape: f32[8,1], index: 5, kind: input, shape index: {}]
  %s6 = inlined_call_operand.vmem [shape: f32[8,1], index: 6, kind: input, shape index: {}]
  %s7 = inlined_call_operand.vmem [shape: f32[32,128], index: 7, kind: output, shape index: {}]
  %s8 = sld [smem:[#allocation0]]
  $region38: #{inconv_forward.1} parent=0
    _
  %s10 = ssub.s32 1, %s8
  %s11 = scalar_select 0, %s10, %s8
  // Predicated region
  $region2: #{inconv_forward.1} parent=0 // pred_check
    _
  $region3: #{inconv_forward.1} parent=0 // pred_check_branch
    %13 = sbr.rel (0) target = $region5
  $region4: #{inconv_forward.1} parent=0 // pred_region
    _
  $region5: #{inconv_forward.1} parent=0 // pred_fallthru
    _
  // Predicated region
  $region6: #{inconv_forward.1} parent=0 // pred_check
    _
  $region7: #{inconv_forward.1} parent=0 // pred_check_branch
    %15 = sbr.rel (0) target = $region9
  $region8: #{inconv_forward.1} parent=0 // pred_region
    _
  $region9: #{inconv_forward.1} parent=0 // pred_fallthru
    _
  // Predicated region
  $region10: #{inconv_forward.1} parent=0 // pred_check
    _
  $region11: #{inconv_forward.1} parent=0 // pred_check_branch
    %17 = sbr.rel (0) target = $region13
  $region12: #{inconv_forward.1} parent=0 // pred_region
    _
  $region13: #{inconv_forward.1} parent=0 // pred_fallthru
    _
  // Predicated region
  $region14: #{inconv_forward.1} parent=0 // pred_check
    _
  $region15: #{inconv_forward.1} parent=0 // pred_check_branch
    %19 = sbr.rel (0) target = $region17
  $region16: #{inconv_forward.1} parent=0 // pred_region
    _
  $region17: #{inconv_forward.1} parent=0 // pred_fallthru
    _
  // Predicated region
  $region18: #{inconv_forward.1} parent=0 // pred_check
    _
  $region19: #{inconv_forward.1} parent=0 // pred_check_branch
    %21 = sbr.rel (0) target = $region21
  $region20: #{inconv_forward.1} parent=0 // pred_region
    _
  $region21: #{inconv_forward.1} parent=0 // pred_fallthru
    _
  // Predicated region
  $region22: #{inconv_forward.1} parent=0 // pred_check
    _
  $region23: #{inconv_forward.1} parent=0 // pred_check_branch
    %23 = sbr.rel (0) target = $region25
  $region24: #{inconv_forward.1} parent=0 // pred_region
    _
  $region25: #{inconv_forward.1} parent=0 // pred_fallthru
    _
  // Predicated region
  $region26: #{inconv_forward.1} parent=0 // pred_check
    _
  $region27: #{inconv_forward.1} parent=0 // pred_check_branch
    %25 = sbr.rel (0) target = $region29
  $region28: #{inconv_forward.1} parent=0 // pred_region
    _
  $region29: #{inconv_forward.1} parent=0 // pred_fallthru
    _
  %v26 = vlaneseq
  %v27 = vand.u32 %v26, 127
  %v28 = vlaneseq
  %v29 = vshrl.u32 %v28, 7
  %vm30 = vcmp.lt.s32.totalorder %v27, 0
  %v31 = vsub.s32 0, %v27
  %v32 = vsel %vm30, %v31, %v27
  %v33 = vshrl.u32 %v32, 3
  %v34 = vand.u32 %v32, 7
  %v35 = vsub.s32 0, %v34
  %v36 = vsel %vm30, %v35, %v34
  %vm37 = vcmp.ne.s32.totalorder %v36, 0
  %vm38 = vcmp.lt.s32.totalorder %v36, 0
  %vm39 = vmand %vm38, %vm37
  %v40 = vadd.s32 %v36, 8
  %v41 = vsel %vm39, %v40, %v36
  %vm42 = vcmp.eq.s32.totalorder %v41, %v29
  %v43 = vsel %vm42, 1, 0
  %v44 = vcvt.s32.f32 %v43
  %vm45 = vcmask 516096
  %46 = vst.msk [vmem:[#allocation2] sm:$0x1] %vm45, 0.0
  %47 = vst.msk [vmem:[#allocation2 + $0x18] sm:$0x1] %vm45, 0.0
  %48 = vst.msk [vmem:[#allocation2 + $0x11] sm:$0x1] %vm45, 0.0
  %49 = vst.msk [vmem:[#allocation2 + $0x29] sm:$0x1] %vm45, 0.0
  %v50 = vld [vmem:[%s0] sm:$0xff]
  %v51 = vld [vmem:[%s0 + $0x8] sm:$0xff]
  %v52 = vld [vmem:[%s0 + $0x10] sm:$0xff]
  %v53 = vld [vmem:[%s0 + $0x18] sm:$0xff]
  %vm54 = vcmask 523264
  %55 = vst.msk [vmem:[#allocation2 + $0x1] sm:$0xff] %vm54, %v50
  %56 = vst.msk [vmem:[#allocation2 + $0x9] sm:$0xff] %vm54, %v51
  %57 = vst.msk [vmem:[#allocation2 + $0x19] sm:$0xff] %vm54, %v52
  %58 = vst.msk [vmem:[#allocation2 + $0x21] sm:$0xff] %vm54, %v53
  %v59 = vld [vmem:[#allocation2] sm:$0xff]
  %v60 = vld [vmem:[#allocation2 + $0x8] sm:$0xff]
  %v61 = vld [vmem:[#allocation2 + $0x18] sm:$0xff]
  %v62 = vld [vmem:[#allocation2 + $0x20] sm:$0xff]
  %v63 = vld [vmem:[%s1] sm:$0xff]
  %v64 = vld [vmem:[%s1 + $0x8] sm:$0xff]
  %v65 = vld [vmem:[%s1 + $0x10] sm:$0xff]
  %v66 = vld [vmem:[%s1 + $0x18] sm:$0xff]
  %v67 = vld [vmem:[%s1 + $0x20] sm:$0xff]
  %v68 = vld [vmem:[%s1 + $0x28] sm:$0xff]
  %v69 = vld [vmem:[%s1 + $0x30] sm:$0xff]
  %v70 = vld [vmem:[%s1 + $0x38] sm:$0xff]
  %v71 = vld [vmem:[#allocation2 + $0x1] sm:$0xff]
  %v72 = vld [vmem:[#allocation2 + $0x9] sm:$0xff]
  %v73 = vld [vmem:[#allocation2 + $0x19] sm:$0xff]
  %v74 = vld [vmem:[#allocation2 + $0x21] sm:$0xff]
  %s75 = scalar_lea.vmem %s1, 64
  %v76 = vld [vmem:[%s75] sm:$0xff]
  %v77 = vld [vmem:[%s75 + $0x8] sm:$0xff]
  %v78 = vld [vmem:[%s75 + $0x10] sm:$0xff]
  %v79 = vld [vmem:[%s75 + $0x18] sm:$0xff]
  %v80 = vld [vmem:[%s75 + $0x20] sm:$0xff]
  %v81 = vld [vmem:[%s75 + $0x28] sm:$0xff]
  %v82 = vld [vmem:[%s75 + $0x30] sm:$0xff]
  %v83 = vld [vmem:[%s75 + $0x38] sm:$0xff]
  %v85 = vsel %vm54, %v71, 0
  %v88 = vsel %vm54, %v72, 0
  %v91 = vsel %vm54, %v73, 0
  %v94 = vsel %vm54, %v74, 0
  %96 = vmatpush.msra.mxu0 0.0
  %97 = vmatpush.msra.mxu0 0.0
  %98 = vmatpush.msra.mxu0 0.0
  %99 = vmatpush.msra.mxu0 0.0
  %100 = vmatpush.msra.mxu0 0.0
  %101 = vmatpush.msra.mxu0 0.0
  %102 = vmatpush.msra.mxu0 0.0
  %103 = vmatpush.msra.mxu0 0.0
  %104 = vmatpush.msra.mxu0 %v83
  %105 = vmatpush.msra.mxu0 %v82
  %106 = vmatpush.msra.mxu0 %v81
  %107 = vmatpush.msra.mxu0 %v80
  %108 = vmatpush.msra.mxu0 %v79
  %109 = vmatpush.msra.mxu0 %v78
  %110 = vmatpush.msra.mxu0 %v77
  %111 = vmatpush.msra.mxu0 %v76
  %112 = vmatmul.f32.gmra.mxu0 %v85
  %v113 = vpop.f32.mrf.mxu0
  %v114 = vadd.f32 0.0, %v113
  %115 = vmatmul.f32.gmra.mxu0 %v88
  %v116 = vpop.f32.mrf.mxu0
  %v117 = vadd.f32 0.0, %v116
  %118 = vmatmul.f32.gmra.mxu0 %v91
  %v119 = vpop.f32.mrf.mxu0
  %v120 = vadd.f32 0.0, %v119
  %121 = vmatmul.f32.gmra.mxu0 %v94
  %v122 = vpop.f32.mrf.mxu0
  %v123 = vadd.f32 0.0, %v122
  %124 = vdwg.mxu0
  %v126 = vsel %vm54, %v59, 0
  %v129 = vsel %vm54, %v60, 0
  %v132 = vsel %vm54, %v61, 0
  %v135 = vsel %vm54, %v62, 0
  %137 = vmatpush.msra.mxu0 0.0
  %138 = vmatpush.msra.mxu0 0.0
  %139 = vmatpush.msra.mxu0 0.0
  %140 = vmatpush.msra.mxu0 0.0
  %141 = vmatpush.msra.mxu0 0.0
  %142 = vmatpush.msra.mxu0 0.0
  %143 = vmatpush.msra.mxu0 0.0
  %144 = vmatpush.msra.mxu0 0.0
  %145 = vmatpush.msra.mxu0 %v70
  %146 = vmatpush.msra.mxu0 %v69
  %147 = vmatpush.msra.mxu0 %v68
  %148 = vmatpush.msra.mxu0 %v67
  %149 = vmatpush.msra.mxu0 %v66
  %150 = vmatpush.msra.mxu0 %v65
  %151 = vmatpush.msra.mxu0 %v64
  %152 = vmatpush.msra.mxu0 %v63
  %153 = vmatmul.f32.gmra.mxu0 %v126
  %v154 = vpop.f32.mrf.mxu0
  %v155 = vadd.f32 %v114, %v154
  %156 = vmatmul.f32.gmra.mxu0 %v129
  %v157 = vpop.f32.mrf.mxu0
  %v158 = vadd.f32 %v117, %v157
  %159 = vmatmul.f32.gmra.mxu0 %v132
  %v160 = vpop.f32.mrf.mxu0
  %v161 = vadd.f32 %v120, %v160
  %162 = vmatmul.f32.gmra.mxu0 %v135
  %v163 = vpop.f32.mrf.mxu0
  %v164 = vadd.f32 %v123, %v163
  %165 = vdwg.mxu0
  %v166 = vld [vmem:[#allocation2 + $0x2] sm:$0xff]
  %v167 = vld [vmem:[#allocation2 + $0xa] sm:$0xff]
  %v168 = vld [vmem:[#allocation2 + $0x1a] sm:$0xff]
  %v169 = vld [vmem:[#allocation2 + $0x22] sm:$0xff]
  %s170 = scalar_lea.vmem %s1, 128
  %v171 = vld [vmem:[%s170] sm:$0xff]
  %v172 = vld [vmem:[%s170 + $0x8] sm:$0xff]
  %v173 = vld [vmem:[%s170 + $0x10] sm:$0xff]
  %v174 = vld [vmem:[%s170 + $0x18] sm:$0xff]
  %v175 = vld [vmem:[%s170 + $0x20] sm:$0xff]
  %v176 = vld [vmem:[%s170 + $0x28] sm:$0xff]
  %v177 = vld [vmem:[%s170 + $0x30] sm:$0xff]
  %v178 = vld [vmem:[%s170 + $0x38] sm:$0xff]
  %v180 = vsel %vm54, %v166, 0
  %v183 = vsel %vm54, %v167, 0
  %v186 = vsel %vm54, %v168, 0
  %v189 = vsel %vm54, %v169, 0
  %191 = vmatpush.msra.mxu0 0.0
  %192 = vmatpush.msra.mxu0 0.0
  %193 = vmatpush.msra.mxu0 0.0
  %194 = vmatpush.msra.mxu0 0.0
  %195 = vmatpush.msra.mxu0 0.0
  %196 = vmatpush.msra.mxu0 0.0
  %197 = vmatpush.msra.mxu0 0.0
  %198 = vmatpush.msra.mxu0 0.0
  %199 = vmatpush.msra.mxu0 %v178
  %200 = vmatpush.msra.mxu0 %v177
  %201 = vmatpush.msra.mxu0 %v176
  %202 = vmatpush.msra.mxu0 %v175
  %203 = vmatpush.msra.mxu0 %v174
  %204 = vmatpush.msra.mxu0 %v173
  %205 = vmatpush.msra.mxu0 %v172
  %206 = vmatpush.msra.mxu0 %v171
  %207 = vmatmul.f32.gmra.mxu0 %v180
  %v208 = vpop.f32.mrf.mxu0
  %v209 = vadd.f32 0.0, %v208
  %210 = vmatmul.f32.gmra.mxu0 %v183
  %v211 = vpop.f32.mrf.mxu0
  %v212 = vadd.f32 0.0, %v211
  %213 = vmatmul.f32.gmra.mxu0 %v186
  %v214 = vpop.f32.mrf.mxu0
  %v215 = vadd.f32 0.0, %v214
  %216 = vmatmul.f32.gmra.mxu0 %v189
  %v217 = vpop.f32.mrf.mxu0
  %v218 = vadd.f32 0.0, %v217
  %219 = vdwg.mxu0
  %v220 = vadd.f32 %v155, %v209
  %v221 = vadd.f32 %v158, %v212
  %v222 = vadd.f32 %v161, %v215
  %v223 = vadd.f32 %v164, %v218
  %v224 = vadd.f32 %v220, %v221
  %v225 = vadd.f32 %v224, %v222
  %v226 = vadd.f32 %v225, %v223
  %v227 = vrot.slane %v226, 4
  %v228 = vadd.f32 %v226, %v227
  %v229 = vrot.slane %v228, 2
  %v230 = vadd.f32 %v228, %v229
  %v231 = vrot.slane %v230, 1
  %v232 = vadd.f32 %v230, %v231
  %v233 = vmul.f32 %v44, %v232
  %234 = vadd.xlane.f32.xlu0 %v233
  %v235 = vpop.xlane.xlu0 %234
  %v236 = vmul.f32 %v235, 0.001953125
  %v237 = vmul.f32 %v44, %v236
  %v238 = vrot.slane %v237, 4
  %v239 = vadd.f32 %v237, %v238
  %v240 = vrot.slane %v239, 2
  %v241 = vadd.f32 %v239, %v240
  %v242 = vrot.slane %v241, 1
  %v243 = vadd.f32 %v241, %v242
  %v244 = vsub.f32 %v220, %v243
  %v245 = vsub.f32 %v221, %v243
  %v246 = vsub.f32 %v222, %v243
  %v247 = vsub.f32 %v223, %v243
  %v248 = vmul.f32 %v244, %v244
  %v249 = vmul.f32 %v245, %v245
  %v250 = vmul.f32 %v246, %v246
  %v251 = vmul.f32 %v247, %v247
  %v252 = vadd.f32 %v248, %v249
  %v253 = vadd.f32 %v252, %v250
  %v254 = vadd.f32 %v253, %v251
  %v255 = vrot.slane %v254, 4
  %v256 = vadd.f32 %v254, %v255
  %v257 = vrot.slane %v256, 2
  %v258 = vadd.f32 %v256, %v257
  %v259 = vrot.slane %v258, 1
  %v260 = vadd.f32 %v258, %v259
  %v261 = vmul.f32 %v44, %v260
  %262 = vadd.xlane.f32.xlu0 %v261
  %v263 = vpop.xlane.xlu0 %262
  %v264 = vmul.f32 %v263, 0.001953125
  %v265 = vld [vmem:[%s2] sm:$0xff]
  %v266 = vadd.f32 %v264, 1e-05
  %v267 = vrsqrt.pop %v266
  %v268 = vmul.f32 %v267, %v266
  %v269 = vmul.f32 %v268, %v267
  %v270 = vmul.f32 0.5, %v269
  %v271 = vsub.f32 1.5, %v270
  %v272 = vmul.f32 %v267, %v271
  %vm273 = vweird.f32 %v266
  %vm274 = vweird.f32 %v267
  %vm275 = vmor %vm273, %vm274
  %v276 = vsel %vm275, %v267, %v272
  %v277 = vmul.f32 %v265, %v276
  %279 = vset.pattern.permute.xlu0 0
  %280 = vperm.xlu0 %279, %v277
  %v281 = vpop.permute.xlu0 %280
  %v283 = vmul.f32 %v44, %v281
  %v284 = vrot.slane %v283, 4
  %v285 = vadd.f32 %v283, %v284
  %v286 = vrot.slane %v285, 2
  %v287 = vadd.f32 %v285, %v286
  %v288 = vrot.slane %v287, 1
  %v289 = vadd.f32 %v287, %v288
  %v290 = vld [vmem:[%s3] sm:$0xff]
  %292 = vset.pattern.permute.xlu0 0
  %293 = vperm.xlu0 %292, %v290
  %v294 = vpop.permute.xlu0 %293
  %v296 = vmul.f32 %v44, %v294
  %v297 = vrot.slane %v296, 4
  %v298 = vadd.f32 %v296, %v297
  %v299 = vrot.slane %v298, 2
  %v300 = vadd.f32 %v298, %v299
  %v301 = vrot.slane %v300, 1
  %v302 = vadd.f32 %v300, %v301
  %v303 = vmul.f32 %v244, %v289
  %v304 = vmul.f32 %v245, %v289
  %v305 = vmul.f32 %v246, %v289
  %v306 = vmul.f32 %v247, %v289
  %v307 = vadd.f32 %v303, %v302
  %v308 = vadd.f32 %v304, %v302
  %v309 = vadd.f32 %v305, %v302
  %v310 = vadd.f32 %v306, %v302
  %v311 = vmax.f32 %v307, 0.0
  %v312 = vmax.f32 %v308, 0.0
  %v313 = vmax.f32 %v309, 0.0
  %v314 = vmax.f32 %v310, 0.0
  %315 = vst [vmem:[#allocation3] sm:$0x1] 0.0
  %316 = vst [vmem:[#allocation3 + $0x18] sm:$0x1] 0.0
  %317 = vst [vmem:[#allocation3 + $0x11] sm:$0x1] 0.0
  %318 = vst [vmem:[#allocation3 + $0x29] sm:$0x1] 0.0
  %319 = vst [vmem:[#allocation3 + $0x1] sm:$0xff] %v311
  %320 = vst [vmem:[#allocation3 + $0x9] sm:$0xff] %v312
  %321 = vst [vmem:[#allocation3 + $0x19] sm:$0xff] %v313
  %322 = vst [vmem:[#allocation3 + $0x21] sm:$0xff] %v314
  %v323 = vld [vmem:[#allocation3] sm:$0xff]
  %v324 = vld [vmem:[#allocation3 + $0x8] sm:$0xff]
  %v325 = vld [vmem:[#allocation3 + $0x18] sm:$0xff]
  %v326 = vld [vmem:[#allocation3 + $0x20] sm:$0xff]
  %v327 = vld [vmem:[%s4] sm:$0xff]
  %v328 = vld [vmem:[%s4 + $0x8] sm:$0xff]
  %v329 = vld [vmem:[%s4 + $0x10] sm:$0xff]
  %v330 = vld [vmem:[%s4 + $0x18] sm:$0xff]
  %v331 = vld [vmem:[%s4 + $0x20] sm:$0xff]
  %v332 = vld [vmem:[%s4 + $0x28] sm:$0xff]
  %v333 = vld [vmem:[%s4 + $0x30] sm:$0xff]
  %v334 = vld [vmem:[%s4 + $0x38] sm:$0xff]
  %v335 = vld [vmem:[%s4 + $0x40] sm:$0xff]
  %v336 = vld [vmem:[%s4 + $0x48] sm:$0xff]
  %v337 = vld [vmem:[%s4 + $0x50] sm:$0xff]
  %v338 = vld [vmem:[%s4 + $0x58] sm:$0xff]
  %v339 = vld [vmem:[%s4 + $0x60] sm:$0xff]
  %v340 = vld [vmem:[%s4 + $0x68] sm:$0xff]
  %v341 = vld [vmem:[%s4 + $0x70] sm:$0xff]
  %v342 = vld [vmem:[%s4 + $0x78] sm:$0xff]
  %v343 = vld [vmem:[#allocation3 + $0x1] sm:$0xff]
  %v344 = vld [vmem:[#allocation3 + $0x9] sm:$0xff]
  %v345 = vld [vmem:[#allocation3 + $0x19] sm:$0xff]
  %v346 = vld [vmem:[#allocation3 + $0x21] sm:$0xff]
  %s347 = scalar_lea.vmem %s4, 128
  %v348 = vld [vmem:[%s347] sm:$0xff]
  %v349 = vld [vmem:[%s347 + $0x8] sm:$0xff]
  %v350 = vld [vmem:[%s347 + $0x10] sm:$0xff]
  %v351 = vld [vmem:[%s347 + $0x18] sm:$0xff]
  %v352 = vld [vmem:[%s347 + $0x20] sm:$0xff]
  %v353 = vld [vmem:[%s347 + $0x28] sm:$0xff]
  %v354 = vld [vmem:[%s347 + $0x30] sm:$0xff]
  %v355 = vld [vmem:[%s347 + $0x38] sm:$0xff]
  %v356 = vld [vmem:[%s347 + $0x40] sm:$0xff]
  %v357 = vld [vmem:[%s347 + $0x48] sm:$0xff]
  %v358 = vld [vmem:[%s347 + $0x50] sm:$0xff]
  %v359 = vld [vmem:[%s347 + $0x58] sm:$0xff]
  %v360 = vld [vmem:[%s347 + $0x60] sm:$0xff]
  %v361 = vld [vmem:[%s347 + $0x68] sm:$0xff]
  %v362 = vld [vmem:[%s347 + $0x70] sm:$0xff]
  %v363 = vld [vmem:[%s347 + $0x78] sm:$0xff]
  %364 = vmatpush.msra.mxu0 %v363
  %365 = vmatpush.msra.mxu0 %v362
  %366 = vmatpush.msra.mxu0 %v361
  %367 = vmatpush.msra.mxu0 %v360
  %368 = vmatpush.msra.mxu0 %v359
  %369 = vmatpush.msra.mxu0 %v358
  %370 = vmatpush.msra.mxu0 %v357
  %371 = vmatpush.msra.mxu0 %v356
  %372 = vmatpush.msra.mxu0 %v355
  %373 = vmatpush.msra.mxu0 %v354
  %374 = vmatpush.msra.mxu0 %v353
  %375 = vmatpush.msra.mxu0 %v352
  %376 = vmatpush.msra.mxu0 %v351
  %377 = vmatpush.msra.mxu0 %v350
  %378 = vmatpush.msra.mxu0 %v349
  %379 = vmatpush.msra.mxu0 %v348
  %380 = vmatmul.f32.gmra.mxu0 %v343
  %v381 = vpop.f32.mrf.mxu0
  %v382 = vadd.f32 0.0, %v381
  %383 = vmatmul.f32.gmra.mxu0 %v344
  %v384 = vpop.f32.mrf.mxu0
  %v385 = vadd.f32 0.0, %v384
  %386 = vmatmul.f32.gmra.mxu0 %v345
  %v387 = vpop.f32.mrf.mxu0
  %v388 = vadd.f32 0.0, %v387
  %389 = vmatmul.f32.gmra.mxu0 %v346
  %v390 = vpop.f32.mrf.mxu0
  %v391 = vadd.f32 0.0, %v390
  %392 = vdwg.mxu0
  %393 = vmatpush.msra.mxu0 %v342
  %394 = vmatpush.msra.mxu0 %v341
  %395 = vmatpush.msra.mxu0 %v340
  %396 = vmatpush.msra.mxu0 %v339
  %397 = vmatpush.msra.mxu0 %v338
  %398 = vmatpush.msra.mxu0 %v337
  %399 = vmatpush.msra.mxu0 %v336
  %400 = vmatpush.msra.mxu0 %v335
  %401 = vmatpush.msra.mxu0 %v334
  %402 = vmatpush.msra.mxu0 %v333
  %403 = vmatpush.msra.mxu0 %v332
  %404 = vmatpush.msra.mxu0 %v331
  %405 = vmatpush.msra.mxu0 %v330
  %406 = vmatpush.msra.mxu0 %v329
  %407 = vmatpush.msra.mxu0 %v328
  %408 = vmatpush.msra.mxu0 %v327
  %409 = vmatmul.f32.gmra.mxu0 %v323
  %v410 = vpop.f32.mrf.mxu0
  %v411 = vadd.f32 %v382, %v410
  %412 = vmatmul.f32.gmra.mxu0 %v324
  %v413 = vpop.f32.mrf.mxu0
  %v414 = vadd.f32 %v385, %v413
  %415 = vmatmul.f32.gmra.mxu0 %v325
  %v416 = vpop.f32.mrf.mxu0
  %v417 = vadd.f32 %v388, %v416
  %418 = vmatmul.f32.gmra.mxu0 %v326
  %v419 = vpop.f32.mrf.mxu0
  %v420 = vadd.f32 %v391, %v419
  %421 = vdwg.mxu0
  %v422 = vld [vmem:[#allocation3 + $0x2] sm:$0xff]
  %v423 = vld [vmem:[#allocation3 + $0xa] sm:$0xff]
  %v424 = vld [vmem:[#allocation3 + $0x1a] sm:$0xff]
  %v425 = vld [vmem:[#allocation3 + $0x22] sm:$0xff]
  %s426 = scalar_lea.vmem %s4, 256
  %v427 = vld [vmem:[%s426] sm:$0xff]
  %v428 = vld [vmem:[%s426 + $0x8] sm:$0xff]
  %v429 = vld [vmem:[%s426 + $0x10] sm:$0xff]
  %v430 = vld [vmem:[%s426 + $0x18] sm:$0xff]
  %v431 = vld [vmem:[%s426 + $0x20] sm:$0xff]
  %v432 = vld [vmem:[%s426 + $0x28] sm:$0xff]
  %v433 = vld [vmem:[%s426 + $0x30] sm:$0xff]
  %v434 = vld [vmem:[%s426 + $0x38] sm:$0xff]
  %v435 = vld [vmem:[%s426 + $0x40] sm:$0xff]
  %v436 = vld [vmem:[%s426 + $0x48] sm:$0xff]
  %v437 = vld [vmem:[%s426 + $0x50] sm:$0xff]
  %v438 = vld [vmem:[%s426 + $0x58] sm:$0xff]
  %v439 = vld [vmem:[%s426 + $0x60] sm:$0xff]
  %v440 = vld [vmem:[%s426 + $0x68] sm:$0xff]
  %v441 = vld [vmem:[%s426 + $0x70] sm:$0xff]
  %v442 = vld [vmem:[%s426 + $0x78] sm:$0xff]
  %443 = vmatpush.msra.mxu0 %v442
  %444 = vmatpush.msra.mxu0 %v441
  %445 = vmatpush.msra.mxu0 %v440
  %446 = vmatpush.msra.mxu0 %v439
  %447 = vmatpush.msra.mxu0 %v438
  %448 = vmatpush.msra.mxu0 %v437
  %449 = vmatpush.msra.mxu0 %v436
  %450 = vmatpush.msra.mxu0 %v435
  %451 = vmatpush.msra.mxu0 %v434
  %452 = vmatpush.msra.mxu0 %v433
  %453 = vmatpush.msra.mxu0 %v432
  %454 = vmatpush.msra.mxu0 %v431
  %455 = vmatpush.msra.mxu0 %v430
  %456 = vmatpush.msra.mxu0 %v429
  %457 = vmatpush.msra.mxu0 %v428
  %458 = vmatpush.msra.mxu0 %v427
  %459 = vmatmul.f32.gmra.mxu0 %v422
  %v460 = vpop.f32.mrf.mxu0
  %v461 = vadd.f32 0.0, %v460
  %462 = vmatmul.f32.gmra.mxu0 %v423
  %v463 = vpop.f32.mrf.mxu0
  %v464 = vadd.f32 0.0, %v463
  %465 = vmatmul.f32.gmra.mxu0 %v424
  %v466 = vpop.f32.mrf.mxu0
  %v467 = vadd.f32 0.0, %v466
  %468 = vmatmul.f32.gmra.mxu0 %v425
  %v469 = vpop.f32.mrf.mxu0
  %v470 = vadd.f32 0.0, %v469
  %471 = vdwg.mxu0
  %v472 = vadd.f32 %v411, %v461
  %v473 = vadd.f32 %v414, %v464
  %v474 = vadd.f32 %v417, %v467
  %v475 = vadd.f32 %v420, %v470
  %v476 = vadd.f32 %v472, %v473
  %v477 = vadd.f32 %v476, %v474
  %v478 = vadd.f32 %v477, %v475
  %v479 = vrot.slane %v478, 4
  %v480 = vadd.f32 %v478, %v479
  %v481 = vrot.slane %v480, 2
  %v482 = vadd.f32 %v480, %v481
  %v483 = vrot.slane %v482, 1
  %v484 = vadd.f32 %v482, %v483
  %v485 = vmul.f32 %v44, %v484
  %486 = vadd.xlane.f32.xlu0 %v485
  %v487 = vpop.xlane.xlu0 %486
  %v488 = vmul.f32 %v487, 0.001953125
  %v489 = vmul.f32 %v44, %v488
  %v490 = vrot.slane %v489, 4
  %v491 = vadd.f32 %v489, %v490
  %v492 = vrot.slane %v491, 2
  %v493 = vadd.f32 %v491, %v492
  %v494 = vrot.slane %v493, 1
  %v495 = vadd.f32 %v493, %v494
  %v496 = vsub.f32 %v472, %v495
  %v497 = vsub.f32 %v473, %v495
  %v498 = vsub.f32 %v474, %v495
  %v499 = vsub.f32 %v475, %v495
  %v500 = vmul.f32 %v496, %v496
  %v501 = vmul.f32 %v497, %v497
  %v502 = vmul.f32 %v498, %v498
  %v503 = vmul.f32 %v499, %v499
  %v504 = vadd.f32 %v500, %v501
  %v505 = vadd.f32 %v504, %v502
  %v506 = vadd.f32 %v505, %v503
  %v507 = vrot.slane %v506, 4
  %v508 = vadd.f32 %v506, %v507
  %v509 = vrot.slane %v508, 2
  %v510 = vadd.f32 %v508, %v509
  %v511 = vrot.slane %v510, 1
  %v512 = vadd.f32 %v510, %v511
  %v513 = vmul.f32 %v44, %v512
  %514 = vadd.xlane.f32.xlu0 %v513
  %v515 = vpop.xlane.xlu0 %514
  %v516 = vmul.f32 %v515, 0.001953125
  %v517 = vld [vmem:[%s5] sm:$0xff]
  %v518 = vadd.f32 %v516, 1e-05
  %v519 = vrsqrt.pop %v518
  %v520 = vmul.f32 %v519, %v518
  %v521 = vmul.f32 %v520, %v519
  %v522 = vmul.f32 0.5, %v521
  %v523 = vsub.f32 1.5, %v522
  %v524 = vmul.f32 %v519, %v523
  %vm525 = vweird.f32 %v518
  %vm526 = vweird.f32 %v519
  %vm527 = vmor %vm525, %vm526
  %v528 = vsel %vm527, %v519, %v524
  %v529 = vmul.f32 %v517, %v528
  %531 = vset.pattern.permute.xlu0 0
  %532 = vperm.xlu0 %531, %v529
  %v533 = vpop.permute.xlu0 %532
  %v535 = vmul.f32 %v44, %v533
  %v536 = vrot.slane %v535, 4
  %v537 = vadd.f32 %v535, %v536
  %v538 = vrot.slane %v537, 2
  %v539 = vadd.f32 %v537, %v538
  %v540 = vrot.slane %v539, 1
  %v541 = vadd.f32 %v539, %v540
  %v542 = vld [vmem:[%s6] sm:$0xff]
  %544 = vset.pattern.permute.xlu0 0
  %545 = vperm.xlu0 %544, %v542
  %v546 = vpop.permute.xlu0 %545
  %v548 = vmul.f32 %v44, %v546
  %v549 = vrot.slane %v548, 4
  %v550 = vadd.f32 %v548, %v549
  %v551 = vrot.slane %v550, 2
  %v552 = vadd.f32 %v550, %v551
  %v553 = vrot.slane %v552, 1
  %v554 = vadd.f32 %v552, %v553
  %v555 = vmul.f32 %v496, %v541
  %v556 = vmul.f32 %v497, %v541
  %v557 = vmul.f32 %v498, %v541
  %v558 = vmul.f32 %v499, %v541
  %v559 = vadd.f32 %v555, %v554
  %v560 = vadd.f32 %v556, %v554
  %v561 = vadd.f32 %v557, %v554
  %v562 = vadd.f32 %v558, %v554
  %v563 = vmax.f32 %v559, 0.0
  %v564 = vmax.f32 %v560, 0.0
  %v565 = vmax.f32 %v561, 0.0
  %v566 = vmax.f32 %v562, 0.0
  %567 = vst [vmem:[%s7] sm:$0xff] %v563
  %568 = vst [vmem:[%s7 + $0x8] sm:$0xff] %v564
  %569 = vst [vmem:[%s7 + $0x10] sm:$0xff] %v565
  %570 = vst [vmem:[%s7 + $0x18] sm:$0xff] %v566
  // Predicated region
  $region30: #{inconv_forward.1} parent=0 // pred_check
    _
  $region31: #{inconv_forward.1} parent=0 // pred_check_branch
    %572 = sbr.rel (0) target = $region33
  $region32: #{inconv_forward.1} parent=0 // pred_region
    _
  $region33: #{inconv_forward.1} parent=0 // pred_fallthru
    _
  // Predicated region
  $region34: #{inconv_forward.1} parent=0 // pred_check
    _
  $region35: #{inconv_forward.1} parent=0 // pred_check_branch
    %574 = sbr.rel (0) target = $region37
  $region36: #{inconv_forward.1} parent=0 // pred_region
    _
  $region37: #{inconv_forward.1} parent=0 // pred_fallthru
    _

</llo_original>
